<compile_context>
chip_gen: v7x
topology: tpu7x:2x2x1
jax: 0.10.0
libtpu: 0.0.40
codegen_flags: <defaults>
</compile_context>

<pallas_src>
import functools

import jax
import jax.numpy as jnp
from jax.experimental import pallas as pl
from jax.experimental.pallas import tpu as pltpu

IN_DIM, HID, OUT_DIM = 11, 128, 2


def mlp_kernel(x_ref, w1_ref, b1_ref, w2_ref, b2_ref, w3_ref, b3_ref, o_ref):
    # Layer 1: Linear(11 -> 128) + ReLU. bf16 operands, f32 accumulation on MXU.
    h1 = jnp.dot(x_ref[...], w1_ref[...], preferred_element_type=jnp.float32)
    h1 = jnp.maximum(h1 + b1_ref[...], 0.0)
    # Layer 2: Linear(128 -> 128) + ReLU.
    h2 = jnp.dot(h1.astype(jnp.bfloat16), w2_ref[...],
                 preferred_element_type=jnp.float32)
    h2 = jnp.maximum(h2 + b2_ref[...], 0.0)
    # Layer 3: Linear(128 -> 2).
    out = jnp.dot(h2.astype(jnp.bfloat16), w3_ref[...],
                  preferred_element_type=jnp.float32) + b3_ref[...]
    o_ref[...] = out.astype(o_ref.dtype)


def _round_up(n, m):
    return (n + m - 1) // m * m


def neural_network_forward(x, params, *, tb=2048):
    """y = MLP(flatten(x)).  x: (B, ...) with prod(...) == 11.  Returns (B, 2) f32."""
    w1t, b1, w2t, b2, w3t, b3 = params
    B = x.shape[0]
    x = x.reshape(B, -1)                      # nn.Flatten
    assert x.shape[1] == IN_DIM, x.shape

    # bf16 matmul operands (MXU fast path, halves HBM traffic for x); f32 biases.
    x16 = x.astype(jnp.bfloat16)
    w1t16, w2t16, w3t16 = (w.astype(jnp.bfloat16) for w in (w1t, w2t, w3t))

    # Batch tile: multiple of 16 (bf16 sublane pack); big enough to amortize
    # per-step overhead, small enough that double-buffered (TB,11) inputs plus
    # (TB,128) f32 intermediates fit VMEM with lots of headroom.
    TB = min(tb, _round_up(B, 16))
    B_pad = _round_up(B, TB)
    if B_pad != B:
        x16 = jnp.pad(x16, ((0, B_pad - B), (0, 0)))
    grid = (pl.cdiv(B_pad, TB),)

    # Weights/biases: constant index_map -> resident in VMEM across grid steps.
    resident = lambda a: pl.BlockSpec(a.shape, lambda i, _nd=a.ndim: (0,) * _nd)

    n_w = IN_DIM * HID + HID * HID + HID * OUT_DIM
    flops = 2 * B_pad * n_w
    bytes_accessed = (B_pad * IN_DIM * 2          # bf16 input
                      + B_pad * OUT_DIM * 4       # f32 output
                      + n_w * 2                   # bf16 weights (read once)
                      + (HID + HID + OUT_DIM) * 4)  # f32 biases

    out = pl.pallas_call(
        mlp_kernel,
        out_shape=jax.ShapeDtypeStruct((B_pad, OUT_DIM), jnp.float32),
        grid=grid,
        in_specs=[pl.BlockSpec((TB, IN_DIM), lambda i: (i, 0)),
                  resident(w1t16), resident(b1),
                  resident(w2t16), resident(b2),
                  resident(w3t16), resident(b3)],
        out_specs=pl.BlockSpec((TB, OUT_DIM), lambda i: (i, 0)),
        compiler_params=pltpu.CompilerParams(
            dimension_semantics=("parallel",),      # shard batch across TCs (v7x)
            vmem_limit_bytes=32 * 1024 * 1024),     # safe on v5e/v6e/v7x
        cost_estimate=pl.CostEstimate(flops=flops, transcendentals=0,
                                      bytes_accessed=bytes_accessed),
    )(x16, w1t16, b1, w2t16, b2, w3t16, b3)
    return out[:B]


def init_params(key):
    # Deterministic init mimicking torch.nn.Linear default (uniform +/- 1/sqrt(fan_in)).
    dims = [(IN_DIM, HID), (HID, HID), (HID, OUT_DIM)]
    params = []
    for i, (fan_in, fan_out) in enumerate(dims):
        kw, kb = jax.random.split(jax.random.fold_in(key, i))
        bound = 1.0 / jnp.sqrt(float(fan_in))
        w_t = jax.random.uniform(kw, (fan_in, fan_out), jnp.float32, -bound, bound)
        b = jax.random.uniform(kb, (1, fan_out), jnp.float32, -bound, bound)
        params.extend([w_t, b])
    return tuple(params)


def reference_forward(x, params):
    # Pure-JAX reference with the same bf16 operand rounding as the kernel,
    # exact f32 matmuls (HIGHEST precision), f32 bias adds.
    w1t, b1, w2t, b2, w3t, b3 = params
    x = x.reshape(x.shape[0], -1)
    dot = functools.partial(jnp.dot, precision=jax.lax.Precision.HIGHEST)
    r = lambda a: a.astype(jnp.bfloat16).astype(jnp.float32)
    h1 = jnp.maximum(dot(r(x), r(w1t)) + b1, 0.0)
    h2 = jnp.maximum(dot(r(h1), r(w2t)) + b2, 0.0)
    return dot(r(h2), r(w3t)) + b3


if __name__ == "__main__":
    key = jax.random.PRNGKey(0)
    kx, kp = jax.random.split(key)
    params = init_params(kp)

    # Small single-tile case (grid of 1).
    batch = 8
    x = jax.random.normal(kx, (batch, IN_DIM), dtype=jnp.float32)
    out = jax.block_until_ready(neural_network_forward(x, params))
    ref = reference_forward(x, params)
    assert out.shape == (batch, OUT_DIM), out.shape
    assert jnp.allclose(out, ref, atol=1e-2, rtol=1e-2), "mismatch vs reference (B=8)"

    # Multi-tile case exercising the batch grid + padding path (B=300, TB=128 -> grid=3).
    batch2 = 300
    x2 = jax.random.normal(jax.random.fold_in(kx, 1), (batch2, IN_DIM), dtype=jnp.float32)
    out2 = jax.block_until_ready(neural_network_forward(x2, params, tb=128))
    ref2 = reference_forward(x2, params)
    assert out2.shape == (batch2, OUT_DIM), out2.shape
    assert jnp.allclose(out2, ref2, atol=1e-2, rtol=1e-2), "mismatch vs reference (B=300)"

    print("KERNEL_OK")
</pallas_src>

<mosaic_0001>
module attributes {stable_mosaic.version = 11 : i64} {
  func.func @mlp_kernel(%arg0: i32, %arg1: memref<16x11xbf16, #tpu.memory_space<vmem>>, %arg2: memref<11x128xbf16, #tpu.memory_space<vmem>>, %arg3: memref<1x128xf32, #tpu.memory_space<vmem>>, %arg4: memref<128x128xbf16, #tpu.memory_space<vmem>>, %arg5: memref<1x128xf32, #tpu.memory_space<vmem>>, %arg6: memref<128x2xbf16, #tpu.memory_space<vmem>>, %arg7: memref<1x2xf32, #tpu.memory_space<vmem>>, %arg8: memref<16x2xf32, #tpu.memory_space<vmem>>) attributes {dimension_semantics = [#tpu.dimension_semantics<parallel>], iteration_bounds = array<i64: 1>, scalar_prefetch = 0 : i64, scratch_operands = 0 : i64, tpu.core_type = #tpu.core_type<tc>, window_params = [{transform_indices = @transform_0, window_bounds = array<i64: 16, 11>}, {pipeline_mode = #tpu.pipeline_mode<synchronous>, transform_indices = @transform_1, window_bounds = array<i64: 11, 128>}, {pipeline_mode = #tpu.pipeline_mode<synchronous>, transform_indices = @transform_2, window_bounds = array<i64: 1, 128>}, {pipeline_mode = #tpu.pipeline_mode<synchronous>, transform_indices = @transform_3, window_bounds = array<i64: 128, 128>}, {pipeline_mode = #tpu.pipeline_mode<synchronous>, transform_indices = @transform_4, window_bounds = array<i64: 1, 128>}, {pipeline_mode = #tpu.pipeline_mode<synchronous>, transform_indices = @transform_5, window_bounds = array<i64: 128, 2>}, {pipeline_mode = #tpu.pipeline_mode<synchronous>, transform_indices = @transform_6, window_bounds = array<i64: 1, 2>}, {transform_indices = @transform_7, window_bounds = array<i64: 16, 2>}]} {
    %c0 = arith.constant 0 : index
    %c0_0 = arith.constant 0 : index
    %0 = vector.load %arg1[%c0, %c0_0] : memref<16x11xbf16, #tpu.memory_space<vmem>>, vector<16x11xbf16>
    %c0_1 = arith.constant 0 : index
    %c0_2 = arith.constant 0 : index
    %1 = vector.load %arg2[%c0_1, %c0_2] : memref<11x128xbf16, #tpu.memory_space<vmem>>, vector<11x128xbf16>
    %cst = arith.constant dense<0.000000e+00> : vector<16x128xf32>
    %2 = tpu.matmul %0, %1, %cst {dimension_numbers = #tpu.dot_dimension_numbers<[1], [0], [0], [1], [0, 0, 1, 1], [], []>} : vector<16x11xbf16>, vector<11x128xbf16>, vector<16x128xf32> -> vector<16x128xf32>
    %c0_3 = arith.constant 0 : index
    %c0_4 = arith.constant 0 : index
    %3 = vector.load %arg3[%c0_3, %c0_4] : memref<1x128xf32, #tpu.memory_space<vmem>>, vector<1x128xf32>
    %4 = vector.broadcast %3 : vector<1x128xf32> to vector<16x128xf32>
    %5 = arith.addf %2, %4 : vector<16x128xf32>
    %cst_5 = arith.constant 0.000000e+00 : f32
    %6 = vector.broadcast %cst_5 : f32 to vector<16x128xf32>
    %7 = arith.maximumf %5, %6 : vector<16x128xf32>
    %8 = arith.truncf %7 : vector<16x128xf32> to vector<16x128xbf16>
    %c0_6 = arith.constant 0 : index
    %c0_7 = arith.constant 0 : index
    %9 = vector.load %arg4[%c0_6, %c0_7] : memref<128x128xbf16, #tpu.memory_space<vmem>>, vector<128x128xbf16>
    %cst_8 = arith.constant dense<0.000000e+00> : vector<16x128xf32>
    %10 = tpu.matmul %8, %9, %cst_8 {dimension_numbers = #tpu.dot_dimension_numbers<[1], [0], [0], [1], [0, 0, 1, 1], [], []>} : vector<16x128xbf16>, vector<128x128xbf16>, vector<16x128xf32> -> vector<16x128xf32>
    %c0_9 = arith.constant 0 : index
    %c0_10 = arith.constant 0 : index
    %11 = vector.load %arg5[%c0_9, %c0_10] : memref<1x128xf32, #tpu.memory_space<vmem>>, vector<1x128xf32>
    %12 = vector.broadcast %11 : vector<1x128xf32> to vector<16x128xf32>
    %13 = arith.addf %10, %12 : vector<16x128xf32>
    %cst_11 = arith.constant 0.000000e+00 : f32
    %14 = vector.broadcast %cst_11 : f32 to vector<16x128xf32>
    %15 = arith.maximumf %13, %14 : vector<16x128xf32>
    %16 = arith.truncf %15 : vector<16x128xf32> to vector<16x128xbf16>
    %c0_12 = arith.constant 0 : index
    %c0_13 = arith.constant 0 : index
    %17 = vector.load %arg6[%c0_12, %c0_13] : memref<128x2xbf16, #tpu.memory_space<vmem>>, vector<128x2xbf16>
    %cst_14 = arith.constant dense<0.000000e+00> : vector<16x2xf32>
    %18 = tpu.matmul %16, %17, %cst_14 {dimension_numbers = #tpu.dot_dimension_numbers<[1], [0], [0], [1], [0, 0, 1, 1], [], []>} : vector<16x128xbf16>, vector<128x2xbf16>, vector<16x2xf32> -> vector<16x2xf32>
    %c0_15 = arith.constant 0 : index
    %c0_16 = arith.constant 0 : index
    %19 = vector.load %arg7[%c0_15, %c0_16] : memref<1x2xf32, #tpu.memory_space<vmem>>, vector<1x2xf32>
    %20 = vector.broadcast %19 : vector<1x2xf32> to vector<16x2xf32>
    %21 = arith.addf %18, %20 : vector<16x2xf32>
    %c0_17 = arith.constant 0 : index
    %c0_18 = arith.constant 0 : index
    %22 = vector.load %arg8[%c0_17, %c0_18] : memref<16x2xf32, #tpu.memory_space<vmem>>, vector<16x2xf32>
    tpu.vector_store %arg8[%c0_17, %c0_18], %21 {strides = array<i32>} : memref<16x2xf32, #tpu.memory_space<vmem>>, vector<16x2xf32>,
    return
  }
  func.func @transform_0(%arg0: i32) -> (i32, i32) {
    %c0_i32 = arith.constant 0 : i32
    %c0_i32_0 = arith.constant 0 : i32
    return %arg0, %c0_i32 : i32, i32
  }
  func.func @transform_1(%arg0: i32) -> (i32, i32) {
    %c0_i32 = arith.constant 0 : i32
    %c0_i32_0 = arith.constant 0 : i32
    %c0_i32_1 = arith.constant 0 : i32
    return %c0_i32, %c0_i32_0 : i32, i32
  }
  func.func @transform_2(%arg0: i32) -> (i32, i32) {
    %c0_i32 = arith.constant 0 : i32
    %c0_i32_0 = arith.constant 0 : i32
    %c0_i32_1 = arith.constant 0 : i32
    return %c0_i32, %c0_i32_0 : i32, i32
  }
  func.func @transform_3(%arg0: i32) -> (i32, i32) {
    %c0_i32 = arith.constant 0 : i32
    %c0_i32_0 = arith.constant 0 : i32
    %c0_i32_1 = arith.constant 0 : i32
    return %c0_i32, %c0_i32_0 : i32, i32
  }
  func.func @transform_4(%arg0: i32) -> (i32, i32) {
    %c0_i32 = arith.constant 0 : i32
    %c0_i32_0 = arith.constant 0 : i32
    %c0_i32_1 = arith.constant 0 : i32
    return %c0_i32, %c0_i32_0 : i32, i32
  }
  func.func @transform_5(%arg0: i32) -> (i32, i32) {
    %c0_i32 = arith.constant 0 : i32
    %c0_i32_0 = arith.constant 0 : i32
    %c0_i32_1 = arith.constant 0 : i32
    return %c0_i32, %c0_i32_0 : i32, i32
  }
  func.func @transform_6(%arg0: i32) -> (i32, i32) {
    %c0_i32 = arith.constant 0 : i32
    %c0_i32_0 = arith.constant 0 : i32
    %c0_i32_1 = arith.constant 0 : i32
    return %c0_i32, %c0_i32_0 : i32, i32
  }
  func.func @transform_7(%arg0: i32) -> (i32, i32) {
    %c0_i32 = arith.constant 0 : i32
    %c0_i32_0 = arith.constant 0 : i32
    return %arg0, %c0_i32 : i32, i32
  }
}

</mosaic_0001>

<llo_original>
// kernel: tpu_custom_call.1
$region0: #{tpu_custom_call.1}
  #allocation0 [shape = 'u32[]', space=smem, size = 0x4, offset = 0x4, fixed_abs, tag = 'smem constant byte address 0x4 - core index']
  #allocation1 [shape = 'u32[144,128]{1,0:T(1,128)}', space=vmem, size = 0x12000, scoped, tag = 'internal scratch']
  %s0 = inlined_call_operand.vmem [shape: bf16[16,11], index: 0, kind: input, shape index: {}]
  %s1 = inlined_call_operand.hbm [shape: bf16[11,128], index: 1, kind: input, shape index: {}]
  %s2 = inlined_call_operand.vmem [shape: f32[1,128], index: 2, kind: input, shape index: {}]
  %s3 = inlined_call_operand.vmem [shape: bf16[128,128], index: 3, kind: input, shape index: {}]
  %s4 = inlined_call_operand.vmem [shape: f32[1,128], index: 4, kind: input, shape index: {}]
  %s5 = inlined_call_operand.vmem [shape: bf16[128,2], index: 5, kind: input, shape index: {}]
  %s6 = inlined_call_operand.vmem [shape: f32[1,2], index: 6, kind: input, shape index: {}]
  %s7 = inlined_call_operand.vmem [shape: f32[16,2], index: 7, kind: output, shape index: {}]
  %s8 = sld [smem:[#allocation0]]
  $region42: #{tpu_custom_call.1} parent=0
    _
  %s10 = ssub.s32 1, %s8
  %s11 = scalar_select 0, %s10, %s8
  $region1: #{tpu_custom_call.1} parent=0
    #allocation2 [shape = 'u8[4096]{0}', space=vmem, size = 0x1000, scoped, tag = 'input window, operand 1, single buffered']
    #allocation3 [shape = 's32[1]{0}', space=sflag, size = 0x4, scoped, tag = 'scoped memory for tpu_custom_call.1']
    %12 = vsyncpa [#allocation3], 0
    // Predicated region
    $region2: #{tpu_custom_call.1} parent=1 // pred_check
      _
    $region3: #{tpu_custom_call.1} parent=1 // pred_check_branch
      %14 = sbr.rel (0) target = $region5
    $region4: #{tpu_custom_call.1} parent=1 // pred_region
      _
    $region5: #{tpu_custom_call.1} parent=1 // pred_fallthru
      _
    // Predicated region
    $region6: #{tpu_custom_call.1} parent=1 // pred_check
      _
    $region7: #{tpu_custom_call.1} parent=1 // pred_check_branch
      %16 = sbr.rel (0) target = $region9
    $region8: #{tpu_custom_call.1} parent=1 // pred_region
      %s18 = ssub.s32 128, 128
      %19 = vsyncadd [#allocation3], %s18
      %s20 = sshll.u32 [#allocation2], 4
      %s21 = int_to_ptr.vmem [resolvable:$true] %s20
      %26 = dma.hbm_to_vmem [thread:$0]  %s1, 128, %s21, [#allocation3], 64, 64, 4
    $region9: #{tpu_custom_call.1} parent=1 // pred_fallthru
      _
    // Predicated region
    $region10: #{tpu_custom_call.1} parent=1 // pred_check
      _
    $region11: #{tpu_custom_call.1} parent=1 // pred_check_branch
      %28 = sbr.rel (0) target = $region13
    $region12: #{tpu_custom_call.1} parent=1 // pred_region
      _
    $region13: #{tpu_custom_call.1} parent=1 // pred_fallthru
      _
    // Predicated region
    $region14: #{tpu_custom_call.1} parent=1 // pred_check
      _
    $region15: #{tpu_custom_call.1} parent=1 // pred_check_branch
      %30 = sbr.rel (0) target = $region17
    $region16: #{tpu_custom_call.1} parent=1 // pred_region
      _
    $region17: #{tpu_custom_call.1} parent=1 // pred_fallthru
      _
    // Predicated region
    $region18: #{tpu_custom_call.1} parent=1 // pred_check
      _
    $region19: #{tpu_custom_call.1} parent=1 // pred_check_branch
      %32 = sbr.rel (0) target = $region21
    $region20: #{tpu_custom_call.1} parent=1 // pred_region
      _
    $region21: #{tpu_custom_call.1} parent=1 // pred_fallthru
      _
    // Predicated region
    $region22: #{tpu_custom_call.1} parent=1 // pred_check
      _
    $region23: #{tpu_custom_call.1} parent=1 // pred_check_branch
      %34 = sbr.rel (0) target = $region25
    $region24: #{tpu_custom_call.1} parent=1 // pred_region
      _
    $region25: #{tpu_custom_call.1} parent=1 // pred_fallthru
      _
    // Predicated region
    $region26: #{tpu_custom_call.1} parent=1 // pred_check
      _
    $region27: #{tpu_custom_call.1} parent=1 // pred_check_branch
      %36 = sbr.rel (0) target = $region29
    $region28: #{tpu_custom_call.1} parent=1 // pred_region
      _
    $region29: #{tpu_custom_call.1} parent=1 // pred_fallthru
      _
    // Predicated region
    $region30: #{tpu_custom_call.1} parent=1 // pred_check
      _
    $region31: #{tpu_custom_call.1} parent=1 // pred_check_branch
      %38 = sbr.rel (0) target = $region33
    $region32: #{tpu_custom_call.1} parent=1 // pred_region
      %39 = dma.done [#allocation3], 128
    $region33: #{tpu_custom_call.1} parent=1 // pred_fallthru
      _
    %v41 = vld [vmem:[%s0] sm:$0xf]
    %v42 = vld [vmem:[%s0 + $0x4] sm:$0xf]
    %v43 = vld [vmem:[#allocation2] sm:$0xf]
    %v44 = vld [vmem:[#allocation2 + $0x4] sm:$0x3]
    %v45 = vld [vmem:[%s2] sm:$0x1]
    %v47 = vlaneseq
    %v48 = vshrl.u32 %v47, 7
    %v49 = vsub.s32 0, %v48
    %v50 = vrot.slane %v45, %v49
    %v54 = vunpack.c.l.b16 %v41
    %v55 = vunpack.c.l.b16 %v42
    %v56 = vpack.c.b16 %v55, %v54
    %v59 = vunpack.c.l.b16 %v43
    %v60 = vunpack.c.l.b16 %v44
    %v61 = vpack.c.b16 %v60, %v59
    %vm62 = vcmask 89088
    %v64 = vsel %vm62, %v56, 0
    %vm66 = vcmask 1044480
    %vm67 = vcmask 1045504
    %v68 = vsel %vm66, 4294967295, 65535
    %v69 = vsel %vm67, %v68, 0
    %v71 = vand.u32 %v61, %v69
    %73 = vmatprep.subr.bf16.mxu0 0
    %74 = vmatpush1.bf16.msra.mxu0 %v71
    %75 = vmatprep.subr.bf16.mxu0 0
    %76 = vmatpush1.bf16.msra.mxu0 0
    %77 = vmatprep.subr.bf16.mxu0 0
    %78 = vmatpush1.bf16.msra.mxu0 0
    %79 = vmatprep.subr.bf16.mxu0 0
    %80 = vmatpush1.bf16.msra.mxu0 0
    %81 = vmatprep.subr.bf16.mxu0 0
    %82 = vmatpush1.bf16.msra.mxu0 0
    %83 = vmatprep.subr.bf16.mxu0 0
    %84 = vmatpush1.bf16.msra.mxu0 0
    %85 = vmatprep.subr.bf16.mxu0 0
    %86 = vmatpush1.bf16.msra.mxu0 0
    %87 = vmatprep.subr.bf16.mxu0 0
    %88 = vmatpush1.bf16.msra.mxu0 0
    %89 = vmatprep.subr.bf16.mxu0 0
    %90 = vmatpush1.bf16.msra.mxu0 0
    %91 = vmatprep.subr.bf16.mxu0 0
    %92 = vmatpush1.bf16.msra.mxu0 0
    %93 = vmatprep.subr.bf16.mxu0 0
    %94 = vmatpush1.bf16.msra.mxu0 0
    %95 = vmatprep.subr.bf16.mxu0 0
    %96 = vmatpush1.bf16.msra.mxu0 0
    %97 = vmatprep.subr.bf16.mxu0 0
    %98 = vmatpush1.bf16.msra.mxu0 0
    %99 = vmatprep.subr.bf16.mxu0 0
    %100 = vmatpush1.bf16.msra.mxu0 0
    %101 = vmatprep.subr.bf16.mxu0 0
    %102 = vmatpush1.bf16.msra.mxu0 0
    %103 = vmatprep.subr.bf16.mxu0 0
    %104 = vmatpush1.bf16.msra.mxu0 0
    %105 = vmatprep.mubr.bf16.mxu0 0
    %106 = vmatmul.mubr.bf16.gmra.mrb[0].mxu0 %v64
    %v107 = vpop.f32.mrb[0].mxu0
    %v108 = vadd.f32 %v50, %v107
    %v109 = vpop.f32.mrb[0].mxu0
    %v110 = vpop.f32.mrb[0].mxu0
    %v111 = vadd.f32 %v50, %v110
    %v112 = vpop.f32.mrb[0].mxu0
    %113 = vdwg.mxu0
    %v114 = vmax.f32 %v108, 0.0
    %v115 = vmax.f32 %v111, 0.0
    %v116 = vpack.c.bf16 %v115, %v114
    %v117 = vld [vmem:[%s3] sm:$0xf]
    %v118 = vld [vmem:[%s3 + $0x4] sm:$0xf]
    %v119 = vld [vmem:[%s3 + $0x8] sm:$0xf]
    %v120 = vld [vmem:[%s3 + $0xc] sm:$0xf]
    %v121 = vld [vmem:[%s3 + $0x10] sm:$0xf]
    %v122 = vld [vmem:[%s3 + $0x14] sm:$0xf]
    %v123 = vld [vmem:[%s3 + $0x18] sm:$0xf]
    %v124 = vld [vmem:[%s3 + $0x1c] sm:$0xf]
    %v125 = vld [vmem:[%s3 + $0x20] sm:$0xf]
    %v126 = vld [vmem:[%s3 + $0x24] sm:$0xf]
    %v127 = vld [vmem:[%s3 + $0x28] sm:$0xf]
    %v128 = vld [vmem:[%s3 + $0x2c] sm:$0xf]
    %v129 = vld [vmem:[%s3 + $0x30] sm:$0xf]
    %v130 = vld [vmem:[%s3 + $0x34] sm:$0xf]
    %v131 = vld [vmem:[%s3 + $0x38] sm:$0xf]
    %v132 = vld [vmem:[%s3 + $0x3c] sm:$0xf]
    %v133 = vld [vmem:[%s4] sm:$0x1]
    %v135 = vlaneseq
    %v136 = vshrl.u32 %v135, 7
    %v137 = vsub.s32 0, %v136
    %v138 = vrot.slane %v133, %v137
    %v156 = vunpack.c.l.b16 %v117
    %v157 = vunpack.c.l.b16 %v118
    %v158 = vunpack.c.l.b16 %v119
    %v159 = vunpack.c.l.b16 %v120
    %v160 = vunpack.c.l.b16 %v121
    %v161 = vunpack.c.l.b16 %v122
    %v162 = vunpack.c.l.b16 %v123
    %v163 = vunpack.c.l.b16 %v124
    %v164 = vunpack.c.l.b16 %v125
    %v165 = vunpack.c.l.b16 %v126
    %v166 = vunpack.c.l.b16 %v127
    %v167 = vunpack.c.l.b16 %v128
    %v168 = vunpack.c.l.b16 %v129
    %v169 = vunpack.c.l.b16 %v130
    %v170 = vunpack.c.l.b16 %v131
    %v171 = vunpack.c.l.b16 %v132
    %v172 = vpack.c.b16 %v157, %v156
    %v173 = vpack.c.b16 %v159, %v158
    %v174 = vpack.c.b16 %v161, %v160
    %v175 = vpack.c.b16 %v163, %v162
    %v176 = vpack.c.b16 %v165, %v164
    %v177 = vpack.c.b16 %v167, %v166
    %v178 = vpack.c.b16 %v169, %v168
    %v179 = vpack.c.b16 %v171, %v170
    %188 = vmatprep.subr.bf16.mxu0 0
    %189 = vmatpush1.bf16.msra.mxu0 %v172
    %190 = vmatprep.subr.bf16.mxu0 0
    %191 = vmatpush1.bf16.msra.mxu0 %v173
    %192 = vmatprep.subr.bf16.mxu0 0
    %193 = vmatpush1.bf16.msra.mxu0 %v174
    %194 = vmatprep.subr.bf16.mxu0 0
    %195 = vmatpush1.bf16.msra.mxu0 %v175
    %196 = vmatprep.subr.bf16.mxu0 0
    %197 = vmatpush1.bf16.msra.mxu0 %v176
    %198 = vmatprep.subr.bf16.mxu0 0
    %199 = vmatpush1.bf16.msra.mxu0 %v177
    %200 = vmatprep.subr.bf16.mxu0 0
    %201 = vmatpush1.bf16.msra.mxu0 %v178
    %202 = vmatprep.subr.bf16.mxu0 0
    %203 = vmatpush1.bf16.msra.mxu0 %v179
    %204 = vmatprep.subr.bf16.mxu0 0
    %205 = vmatpush1.bf16.msra.mxu0 0
    %206 = vmatprep.subr.bf16.mxu0 0
    %207 = vmatpush1.bf16.msra.mxu0 0
    %208 = vmatprep.subr.bf16.mxu0 0
    %209 = vmatpush1.bf16.msra.mxu0 0
    %210 = vmatprep.subr.bf16.mxu0 0
    %211 = vmatpush1.bf16.msra.mxu0 0
    %212 = vmatprep.subr.bf16.mxu0 0
    %213 = vmatpush1.bf16.msra.mxu0 0
    %214 = vmatprep.subr.bf16.mxu0 0
    %215 = vmatpush1.bf16.msra.mxu0 0
    %216 = vmatprep.subr.bf16.mxu0 0
    %217 = vmatpush1.bf16.msra.mxu0 0
    %218 = vmatprep.subr.bf16.mxu0 0
    %219 = vmatpush1.bf16.msra.mxu0 0
    %220 = vmatprep.mubr.bf16.mxu0 0
    %221 = vmatmul.mubr.bf16.gmra.mrb[0].mxu0 %v116
    %v222 = vpop.f32.mrb[0].mxu0
    %v223 = vadd.f32 %v138, %v222
    %v224 = vpop.f32.mrb[0].mxu0
    %v225 = vpop.f32.mrb[0].mxu0
    %v226 = vadd.f32 %v138, %v225
    %v227 = vpop.f32.mrb[0].mxu0
    %228 = vdwg.mxu0
    %v229 = vmax.f32 %v223, 0.0
    %v230 = vmax.f32 %v226, 0.0
    %v231 = vpack.c.bf16 %v230, %v229
    %v232 = vld [vmem:[%s5] sm:$0xf]
    %v233 = vld [vmem:[%s5 + $0x4] sm:$0xf]
    %v234 = vld [vmem:[%s5 + $0x8] sm:$0xf]
    %v235 = vld [vmem:[%s5 + $0xc] sm:$0xf]
    %v236 = vld [vmem:[%s5 + $0x10] sm:$0xf]
    %v237 = vld [vmem:[%s5 + $0x14] sm:$0xf]
    %v238 = vld [vmem:[%s5 + $0x18] sm:$0xf]
    %v239 = vld [vmem:[%s5 + $0x1c] sm:$0xf]
    %v240 = vld [vmem:[%s5 + $0x20] sm:$0xf]
    %v241 = vld [vmem:[%s5 + $0x24] sm:$0xf]
    %v242 = vld [vmem:[%s5 + $0x28] sm:$0xf]
    %v243 = vld [vmem:[%s5 + $0x2c] sm:$0xf]
    %v244 = vld [vmem:[%s5 + $0x30] sm:$0xf]
    %v245 = vld [vmem:[%s5 + $0x34] sm:$0xf]
    %v246 = vld [vmem:[%s5 + $0x38] sm:$0xf]
    %v247 = vld [vmem:[%s5 + $0x3c] sm:$0xf]
    %v248 = vld [vmem:[%s6] sm:$0x1]
    %v250 = vlaneseq
    %v251 = vshrl.u32 %v250, 7
    %v252 = vsub.s32 0, %v251
    %v253 = vrot.slane %v248, %v252
    %v271 = vunpack.c.l.b16 %v232
    %v272 = vunpack.c.l.b16 %v233
    %v273 = vunpack.c.l.b16 %v234
    %v274 = vunpack.c.l.b16 %v235
    %v275 = vunpack.c.l.b16 %v236
    %v276 = vunpack.c.l.b16 %v237
    %v277 = vunpack.c.l.b16 %v238
    %v278 = vunpack.c.l.b16 %v239
    %v279 = vunpack.c.l.b16 %v240
    %v280 = vunpack.c.l.b16 %v241
    %v281 = vunpack.c.l.b16 %v242
    %v282 = vunpack.c.l.b16 %v243
    %v283 = vunpack.c.l.b16 %v244
    %v284 = vunpack.c.l.b16 %v245
    %v285 = vunpack.c.l.b16 %v246
    %v286 = vunpack.c.l.b16 %v247
    %v287 = vpack.c.b16 %v272, %v271
    %v288 = vpack.c.b16 %v274, %v273
    %v289 = vpack.c.b16 %v276, %v275
    %v290 = vpack.c.b16 %v278, %v277
    %v291 = vpack.c.b16 %v280, %v279
    %v292 = vpack.c.b16 %v282, %v281
    %v293 = vpack.c.b16 %v284, %v283
    %v294 = vpack.c.b16 %v286, %v285
    %303 = vmatprep.subr.bf16.mxu0 0
    %304 = vmatpush1.bf16.msra.mxu0 %v287
    %305 = vmatprep.subr.bf16.mxu0 0
    %306 = vmatpush1.bf16.msra.mxu0 %v288
    %307 = vmatprep.subr.bf16.mxu0 0
    %308 = vmatpush1.bf16.msra.mxu0 %v289
    %309 = vmatprep.subr.bf16.mxu0 0
    %310 = vmatpush1.bf16.msra.mxu0 %v290
    %311 = vmatprep.subr.bf16.mxu0 0
    %312 = vmatpush1.bf16.msra.mxu0 %v291
    %313 = vmatprep.subr.bf16.mxu0 0
    %314 = vmatpush1.bf16.msra.mxu0 %v292
    %315 = vmatprep.subr.bf16.mxu0 0
    %316 = vmatpush1.bf16.msra.mxu0 %v293
    %317 = vmatprep.subr.bf16.mxu0 0
    %318 = vmatpush1.bf16.msra.mxu0 %v294
    %319 = vmatprep.subr.bf16.mxu0 0
    %320 = vmatpush1.bf16.msra.mxu0 0
    %321 = vmatprep.subr.bf16.mxu0 0
    %322 = vmatpush1.bf16.msra.mxu0 0
    %323 = vmatprep.subr.bf16.mxu0 0
    %324 = vmatpush1.bf16.msra.mxu0 0
    %325 = vmatprep.subr.bf16.mxu0 0
    %326 = vmatpush1.bf16.msra.mxu0 0
    %327 = vmatprep.subr.bf16.mxu0 0
    %328 = vmatpush1.bf16.msra.mxu0 0
    %329 = vmatprep.subr.bf16.mxu0 0
    %330 = vmatpush1.bf16.msra.mxu0 0
    %331 = vmatprep.subr.bf16.mxu0 0
    %332 = vmatpush1.bf16.msra.mxu0 0
    %333 = vmatprep.subr.bf16.mxu0 0
    %334 = vmatpush1.bf16.msra.mxu0 0
    %335 = vmatprep.mubr.bf16.mxu0 0
    %336 = vmatmul.mubr.bf16.gmra.mrb[0].mxu0 %v231
    %v337 = vpop.f32.mrb[0].mxu0
    %v338 = vadd.f32 %v253, %v337
    %v339 = vpop.f32.mrb[0].mxu0
    %v340 = vpop.f32.mrb[0].mxu0
    %v341 = vadd.f32 %v253, %v340
    %v342 = vpop.f32.mrb[0].mxu0
    %343 = vdwg.mxu0
    %vm344 = vcmask 15360
    %345 = vst.msk [vmem:[%s7] sm:$0xff] %vm344, %v338
    %346 = vst.msk [vmem:[%s7 + $0x8] sm:$0xff] %vm344, %v341
    // Predicated region
    $region34: #{tpu_custom_call.1} parent=1 // pred_check
      _
    $region35: #{tpu_custom_call.1} parent=1 // pred_check_branch
      %348 = sbr.rel (0) target = $region37
    $region36: #{tpu_custom_call.1} parent=1 // pred_region
      _
    $region37: #{tpu_custom_call.1} parent=1 // pred_fallthru
      _
    // Predicated region
    $region38: #{tpu_custom_call.1} parent=1 // pred_check
      _
    $region39: #{tpu_custom_call.1} parent=1 // pred_check_branch
      %350 = sbr.rel (0) target = $region41
    $region40: #{tpu_custom_call.1} parent=1 // pred_region
      _
    $region41: #{tpu_custom_call.1} parent=1 // pred_fallthru
      _
    %351 = vsyncpa [#allocation3], 1

</llo_original>
